<compile_context>
chip_gen: v6e
topology: v6e:2x2x1
jax: 0.10.0
libtpu: 0.0.40
codegen_flags: <defaults>
</compile_context>

<pallas_src>
import functools
import math

import jax
import jax.numpy as jnp
from jax import lax
from jax.experimental import pallas as pl
from jax.experimental.pallas import tpu as pltpu


def _round_up(x, m):
    return ((x + m - 1) // m) * m


def _linear_kernel(x_ref, w_ref, b_ref, o_ref):
    """Computes one (tm, tn) output tile; K (reduction) is the innermost axis.

    x_ref: (tm, tk)  activation tile
    w_ref: (tn, tk)  weight tile, native nn.Linear (out, in) layout
    b_ref: (1,  tn)  bias tile
    o_ref: (tm, tn)  f32 output tile, resident across the K grid axis
    """
    k = pl.program_id(2)

    @pl.when(k == 0)
    def _():
        # Fold the bias into the accumulator init -- no epilogue pass needed.
        o_ref[...] = jnp.broadcast_to(b_ref[...], o_ref.shape).astype(o_ref.dtype)

    # bf16 operands for the MXU, f32 accumulate.  Contracting dim 1 of both
    # operands == x @ W^T with no in-kernel transpose.
    o_ref[...] += lax.dot_general(
        x_ref[...].astype(jnp.bfloat16),
        w_ref[...].astype(jnp.bfloat16),
        dimension_numbers=(((1,), (1,)), ((), ())),
        preferred_element_type=jnp.float32,
    )


@functools.partial(jax.jit, static_argnames=("tm", "tn", "tk"))
def linear_layer(x, weight, bias, *, tm=512, tn=1024, tk=512):
    """Forward pass of LinearLayer: x @ weight.T + bias.

    x:      (batch, input_size)        float32 (or bfloat16)
    weight: (output_size, input_size)  PyTorch nn.Linear layout -- NOT transposed
    bias:   (output_size,)
    """
    M, K = x.shape
    N, K2 = weight.shape
    assert K == K2, "input_size mismatch between x and weight"

    # Clamp tiles to the (padded) problem size keeping vreg / MXU alignment:
    # M tiles multiple of 8 (sublane), N / K tiles multiple of 128 (lane).
    tm = min(tm, _round_up(M, 8))
    tn = min(tn, _round_up(N, 128))
    tk = min(tk, _round_up(K, 128))

    # v7x has 2 TensorCores: if both parallel axes would collapse to a single
    # block, split the N axis (when it is large enough) so the grid spans both.
    if (_round_up(M, tm) // tm == 1 and _round_up(N, tn) // tn == 1
            and _round_up(N, 128) >= 256):
        tn = _round_up(_round_up(N, 128) // 2, 128)

    Mp, Kp, Np = _round_up(M, tm), _round_up(K, tk), _round_up(N, tn)

    # Pad only when not tile-aligned (static checks -> aligned layers skip
    # every pad and the final slice; no per-call weight transpose anywhere).
    x_in = x if (Mp == M and Kp == K) else jnp.pad(x, ((0, Mp - M), (0, Kp - K)))
    w_in = (weight if (Np == N and Kp == K)
            else jnp.pad(weight, ((0, Np - N), (0, Kp - K))))
    b2 = bias.reshape(1, N)
    b_in = b2 if Np == N else jnp.pad(b2, ((0, 0), (0, Np - N)))

    grid = (Mp // tm, Np // tn, Kp // tk)

    # Accurate streamed-bytes estimate: x is re-read once per N tile, W once
    # per M tile; the f32 output is written once.
    cost = pl.CostEstimate(
        flops=2 * Mp * Np * Kp,
        bytes_accessed=(Mp * Kp * x.dtype.itemsize * grid[1]
                        + Np * Kp * weight.dtype.itemsize * grid[0]
                        + Mp * Np * 4),
        transcendentals=0,
    )

    out = pl.pallas_call(
        _linear_kernel,
        out_shape=jax.ShapeDtypeStruct((Mp, Np), jnp.float32),
        grid_spec=pltpu.PrefetchScalarGridSpec(
            num_scalar_prefetch=0,
            grid=grid,
            in_specs=[
                pl.BlockSpec((tm, tk), lambda i, j, k: (i, k)),   # x tile
                pl.BlockSpec((tn, tk), lambda i, j, k: (j, k)),   # W tile (out, in)
                pl.BlockSpec((1, tn), lambda i, j, k: (0, j)),    # bias tile
            ],
            out_specs=pl.BlockSpec((tm, tn), lambda i, j, k: (i, j)),
        ),
        compiler_params=pltpu.CompilerParams(
            dimension_semantics=("parallel", "parallel", "arbitrary"),
            vmem_limit_bytes=64 * 1024 * 1024,
        ),
        cost_estimate=cost,
    )(x_in, w_in, b_in)

    if Mp != M or Np != N:
        out = out[:M, :N]
    if out.dtype != x.dtype:
        out = out.astype(x.dtype)
    return out


def init_linear_params(key, input_size, output_size):
    """Deterministic parameter init matching nn.Linear defaults + zeroed bias."""
    # PyTorch nn.Linear: weight ~ kaiming_uniform(a=sqrt(5)) ==
    # U(-1/sqrt(fan_in), 1/sqrt(fan_in)); the module then fills bias with 0.0.
    bound = 1.0 / math.sqrt(input_size)
    weight = jax.random.uniform(
        key, (output_size, input_size), dtype=jnp.float32,
        minval=-bound, maxval=bound)
    bias = jnp.zeros((output_size,), dtype=jnp.float32)
    return weight, bias


if __name__ == "__main__":
    input_size = 32
    output_size = 64
    batch = 8

    key = jax.random.PRNGKey(0)
    k_w, k_x = jax.random.split(key)

    weight, bias = init_linear_params(k_w, input_size, output_size)
    x = jax.random.normal(k_x, (batch, input_size), dtype=jnp.float32)

    out = linear_layer(x, weight, bias)
    jax.block_until_ready(out)

    # Sanity check vs plain-JAX f32 reference (kernel uses bf16 MXU operands
    # with f32 accumulation, so allow bf16-level tolerance).
    ref = x @ weight.T + bias
    assert out.shape == (batch, output_size)
    assert jnp.allclose(out, ref, atol=3e-2, rtol=3e-2), "mismatch vs reference"

    print("KERNEL_OK")
</pallas_src>

<mosaic_0001>
module attributes {stable_mosaic.version = 11 : i64} {
  func.func @_linear_kernel(%arg0: i32, %arg1: i32, %arg2: i32, %arg3: memref<8x128xf32, #tpu.memory_space<vmem>>, %arg4: memref<128x128xf32, #tpu.memory_space<vmem>>, %arg5: memref<1x128xf32, #tpu.memory_space<vmem>>, %arg6: memref<8x128xf32, #tpu.memory_space<vmem>>) attributes {dimension_semantics = [#tpu.dimension_semantics<parallel>, #tpu.dimension_semantics<parallel>, #tpu.dimension_semantics<arbitrary>], iteration_bounds = array<i64: 1, 1, 1>, scalar_prefetch = 0 : i64, scratch_operands = 0 : i64, tpu.core_type = #tpu.core_type<tc>, window_params = [{transform_indices = @transform_0, window_bounds = array<i64: 8, 128>}, {transform_indices = @transform_1, window_bounds = array<i64: 128, 128>}, {transform_indices = @transform_2, window_bounds = array<i64: 1, 128>}, {transform_indices = @transform_3, window_bounds = array<i64: 8, 128>}]} {
    %c0_i32 = arith.constant 0 : i32
    %0 = arith.cmpi eq, %arg2, %c0_i32 : i32
    %1 = arith.extui %0 : i1 to i32
    %c0_i32_0 = arith.constant 0 : i32
    %2 = arith.cmpi ne, %1, %c0_i32_0 : i32
    scf.if %2 {
      %c0_8 = arith.constant 0 : index
      %c0_9 = arith.constant 0 : index
      %11 = vector.load %arg5[%c0_8, %c0_9] : memref<1x128xf32, #tpu.memory_space<vmem>>, vector<1x128xf32>
      %12 = vector.shape_cast %11 : vector<1x128xf32> to vector<1x128xf32>
      %13 = vector.broadcast %12 : vector<1x128xf32> to vector<8x128xf32>
      %c0_10 = arith.constant 0 : index
      %c0_11 = arith.constant 0 : index
      %14 = vector.load %arg6[%c0_10, %c0_11] : memref<8x128xf32, #tpu.memory_space<vmem>>, vector<8x128xf32>
      tpu.vector_store %arg6[%c0_10, %c0_11], %13 {strides = array<i32>} : memref<8x128xf32, #tpu.memory_space<vmem>>, vector<8x128xf32>,
    } else {
    }
    %c0 = arith.constant 0 : index
    %c0_1 = arith.constant 0 : index
    %3 = vector.load %arg6[%c0, %c0_1] : memref<8x128xf32, #tpu.memory_space<vmem>>, vector<8x128xf32>
    %c0_2 = arith.constant 0 : index
    %c0_3 = arith.constant 0 : index
    %4 = vector.load %arg3[%c0_2, %c0_3] : memref<8x128xf32, #tpu.memory_space<vmem>>, vector<8x128xf32>
    %5 = arith.truncf %4 : vector<8x128xf32> to vector<8x128xbf16>
    %c0_4 = arith.constant 0 : index
    %c0_5 = arith.constant 0 : index
    %6 = vector.load %arg4[%c0_4, %c0_5] : memref<128x128xf32, #tpu.memory_space<vmem>>, vector<128x128xf32>
    %7 = arith.truncf %6 : vector<128x128xf32> to vector<128x128xbf16>
    %cst = arith.constant dense<0.000000e+00> : vector<8x128xf32>
    %8 = tpu.matmul %5, %7, %cst {dimension_numbers = #tpu.dot_dimension_numbers<[1], [1], [0], [0], [0, 0, 1, 0], [], []>} : vector<8x128xbf16>, vector<128x128xbf16>, vector<8x128xf32> -> vector<8x128xf32>
    %9 = arith.addf %3, %8 : vector<8x128xf32>
    %c0_6 = arith.constant 0 : index
    %c0_7 = arith.constant 0 : index
    %10 = vector.load %arg6[%c0_6, %c0_7] : memref<8x128xf32, #tpu.memory_space<vmem>>, vector<8x128xf32>
    tpu.vector_store %arg6[%c0_6, %c0_7], %9 {strides = array<i32>} : memref<8x128xf32, #tpu.memory_space<vmem>>, vector<8x128xf32>,
    return
  }
  func.func @transform_0(%arg0: i32, %arg1: i32, %arg2: i32) -> (i32, i32) {
    %c0_i32 = arith.constant 0 : i32
    return %arg0, %arg2 : i32, i32
  }
  func.func @transform_1(%arg0: i32, %arg1: i32, %arg2: i32) -> (i32, i32) {
    %c0_i32 = arith.constant 0 : i32
    return %arg1, %arg2 : i32, i32
  }
  func.func @transform_2(%arg0: i32, %arg1: i32, %arg2: i32) -> (i32, i32) {
    %c0_i32 = arith.constant 0 : i32
    %c0_i32_0 = arith.constant 0 : i32
    return %c0_i32, %arg1 : i32, i32
  }
  func.func @transform_3(%arg0: i32, %arg1: i32, %arg2: i32) -> (i32, i32) {
    %c0_i32 = arith.constant 0 : i32
    return %arg0, %arg1 : i32, i32
  }
}

</mosaic_0001>

<llo_original>
// kernel: linear_layer.1
$region0: #{linear_layer.1}
  #allocation0 [shape = 'u32[]', space=smem, size = 0x4, offset = 0x4, fixed_abs, tag = 'smem constant byte address 0x4 - core index']
  #allocation1 [shape = 'u32[144,128]{1,0:T(1,128)}', space=vmem, size = 0x12000, scoped, tag = 'internal scratch']
  %s0 = inlined_call_operand.vmem [shape: f32[8,128], index: 0, kind: input, shape index: {}]
  %s1 = inlined_call_operand.vmem [shape: f32[128,128], index: 1, kind: input, shape index: {}]
  %s2 = inlined_call_operand.vmem [shape: f32[1,128], index: 2, kind: input, shape index: {}]
  %s3 = inlined_call_operand.hbm [shape: f32[8,128], index: 3, kind: output, shape index: {}]
  %s4 = sld [smem:[#allocation0]]
  $region26: #{linear_layer.1} parent=0
    _
  %s6 = ssub.s32 1, %s4
  %s7 = scalar_select 0, %s6, %s4
  $region1: #{linear_layer.1} parent=0
    #allocation2 [shape = 'u8[4096]{0}', space=vmem, size = 0x1000, scoped, tag = 'output window, operand 0, single buffered']
    #allocation3 [shape = 's32[1]{0}', space=sflag, size = 0x4, scoped, tag = 'scoped memory for linear_layer.1']
    %8 = vsyncpa [#allocation3], 0
    // Predicated region
    $region2: #{linear_layer.1} parent=1 // pred_check
      _
    $region3: #{linear_layer.1} parent=1 // pred_check_branch
      %10 = sbr.rel (0) target = $region5
    $region4: #{linear_layer.1} parent=1 // pred_region
      _
    $region5: #{linear_layer.1} parent=1 // pred_fallthru
      _
    // Predicated region
    $region6: #{linear_layer.1} parent=1 // pred_check
      _
    $region7: #{linear_layer.1} parent=1 // pred_check_branch
      %12 = sbr.rel (0) target = $region9
    $region8: #{linear_layer.1} parent=1 // pred_region
      _
    $region9: #{linear_layer.1} parent=1 // pred_fallthru
      _
    // Predicated region
    $region10: #{linear_layer.1} parent=1 // pred_check
      _
    $region11: #{linear_layer.1} parent=1 // pred_check_branch
      %14 = sbr.rel (0) target = $region13
    $region12: #{linear_layer.1} parent=1 // pred_region
      _
    $region13: #{linear_layer.1} parent=1 // pred_fallthru
      _
    %p16 = scmp.eq.s32.totalorder 0, 0
    // Predicated region
    $region14: #{linear_layer.1} parent=1 // pred_check
      %p17 = pneg %p16
    $region15: #{linear_layer.1} parent=1 // pred_check_branch
      %19 = sbr.rel (%p17) target = $region17
    $region16: #{linear_layer.1} parent=1 // pred_region
      %v20 = vld [vmem:[%s2] sm:$0x1]
      %v22 = vlaneseq
      %v23 = vshrl.u32 %v22, 7
      %v24 = vsub.s32 0, %v23
      %v25 = vrot.slane %v20, %v24
      %27 = vst [vmem:[#allocation2] sm:$0xff] %v25
    $region17: #{linear_layer.1} parent=1 // pred_fallthru
      _
    %v28 = vld [vmem:[#allocation2] sm:$0xff]
    %v29 = vld [vmem:[%s0] sm:$0xff]
    %v30 = vpack.c.bf16 %v29, %v29
    %v31 = vld [vmem:[%s1] sm:$0xff]
    %v32 = vld [vmem:[%s1 + $0x8] sm:$0xff]
    %v33 = vld [vmem:[%s1 + $0x10] sm:$0xff]
    %v34 = vld [vmem:[%s1 + $0x18] sm:$0xff]
    %v35 = vld [vmem:[%s1 + $0x20] sm:$0xff]
    %v36 = vld [vmem:[%s1 + $0x28] sm:$0xff]
    %v37 = vld [vmem:[%s1 + $0x30] sm:$0xff]
    %v38 = vld [vmem:[%s1 + $0x38] sm:$0xff]
    %v39 = vld [vmem:[%s1 + $0x40] sm:$0xff]
    %v40 = vld [vmem:[%s1 + $0x48] sm:$0xff]
    %v41 = vld [vmem:[%s1 + $0x50] sm:$0xff]
    %v42 = vld [vmem:[%s1 + $0x58] sm:$0xff]
    %v43 = vld [vmem:[%s1 + $0x60] sm:$0xff]
    %v44 = vld [vmem:[%s1 + $0x68] sm:$0xff]
    %v45 = vld [vmem:[%s1 + $0x70] sm:$0xff]
    %v46 = vld [vmem:[%s1 + $0x78] sm:$0xff]
    %v47 = vpack.c.bf16 %v32, %v31
    %v48 = vpack.c.bf16 %v34, %v33
    %v49 = vpack.c.bf16 %v36, %v35
    %v50 = vpack.c.bf16 %v38, %v37
    %v51 = vpack.c.bf16 %v40, %v39
    %v52 = vpack.c.bf16 %v42, %v41
    %v53 = vpack.c.bf16 %v44, %v43
    %v54 = vpack.c.bf16 %v46, %v45
    %55 = vmatprep.subr.bf16.mxu0 0
    %56 = vmatpush1.bf16.xpose.msra.mxu0 %v54
    %57 = vmatprep.subr.bf16.mxu0 0
    %58 = vmatpush1.bf16.xpose.msra.mxu0 %v53
    %59 = vmatprep.subr.bf16.mxu0 0
    %60 = vmatpush1.bf16.xpose.msra.mxu0 %v52
    %61 = vmatprep.subr.bf16.mxu0 0
    %62 = vmatpush1.bf16.xpose.msra.mxu0 %v51
    %63 = vmatprep.subr.bf16.mxu0 0
    %64 = vmatpush1.bf16.xpose.msra.mxu0 %v50
    %65 = vmatprep.subr.bf16.mxu0 0
    %66 = vmatpush1.bf16.xpose.msra.mxu0 %v49
    %67 = vmatprep.subr.bf16.mxu0 0
    %68 = vmatpush1.bf16.xpose.msra.mxu0 %v48
    %69 = vmatprep.subr.bf16.mxu0 0
    %70 = vmatpush1.bf16.xpose.msra.mxu0 %v47
    %71 = vmatprep.subr.bf16.mxu0 0
    %72 = vmatpush2.bf16.xpose.msra.mxu0 0
    %73 = vmatprep.subr.bf16.mxu0 0
    %74 = vmatpush2.bf16.xpose.msra.mxu0 0
    %75 = vmatprep.subr.bf16.mxu0 0
    %76 = vmatpush2.bf16.xpose.msra.mxu0 0
    %77 = vmatprep.subr.bf16.mxu0 0
    %78 = vmatpush2.bf16.xpose.msra.mxu0 0
    %79 = vmatprep.subr.bf16.mxu0 0
    %80 = vmatpush2.bf16.xpose.msra.mxu0 0
    %81 = vmatprep.subr.bf16.mxu0 0
    %82 = vmatpush2.bf16.xpose.msra.mxu0 0
    %83 = vmatprep.subr.bf16.mxu0 0
    %84 = vmatpush2.bf16.xpose.msra.mxu0 0
    %85 = vmatprep.subr.bf16.mxu0 0
    %86 = vmatpush2.bf16.xpose.msra.mxu0 0
    %87 = vmatprep.mubr.bf16.mxu0 0
    %88 = vmatmul.mubr.bf16.gmra.mxu0 %v30
    %v89 = vpop.f32.mrf.mxu0
    %v90 = vadd.f32 0.0, %v89
    %v91 = vpop.f32.mrf.mxu0
    %v92 = vpop.f32.mrf.mxu0
    %v93 = vpop.f32.mrf.mxu0
    %94 = vdwg.mxu0
    %v95 = vadd.f32 %v28, %v90
    %96 = vst [vmem:[#allocation2] sm:$0xff] %v95
    // Predicated region
    $region18: #{linear_layer.1} parent=1 // pred_check
      _
    $region19: #{linear_layer.1} parent=1 // pred_check_branch
      %98 = sbr.rel (0) target = $region21
    $region20: #{linear_layer.1} parent=1 // pred_region
      %s100 = ssub.s32 128, 128
      %101 = vsyncadd [#allocation3], %s100
      %s103 = sshll.u32 [#allocation2], 4
      %s104 = int_to_ptr.vmem [resolvable:$true] %s103
      %106 = dma.vmem_to_hbm [thread:$0]  %s104, 128, %s3, [#allocation3]
    $region21: #{linear_layer.1} parent=1 // pred_fallthru
      _
    // Predicated region
    $region22: #{linear_layer.1} parent=1 // pred_check
      _
    $region23: #{linear_layer.1} parent=1 // pred_check_branch
      %108 = sbr.rel (0) target = $region25
    $region24: #{linear_layer.1} parent=1 // pred_region
      %109 = dma.done [#allocation3], 128
    $region25: #{linear_layer.1} parent=1 // pred_fallthru
      _
    %110 = vsyncpa [#allocation3], 1

</llo_original>
